<compile_context>
chip_gen: v7x
topology: tpu7x:2x2x1
jax: 0.10.0
libtpu: 0.0.40
codegen_flags: <defaults>
</compile_context>

<pallas_src>
import functools

import jax
import jax.numpy as jnp
from jax import lax
from jax.experimental import pallas as pl
from jax.experimental.pallas import tpu as pltpu


_X_TILE_TARGET = 4 << 20     # ~4 MiB streamed-x tile (near-roofline tile size)
_CHUNK_TRIGGER = 16 << 20    # chunk feature dim if a double-buffered full-N tile exceeds this


def _round_up(x, m):
    return (x + m - 1) // m * m


def _cdiv(a, b):
    return -(-a // b)


def _const_spec(block_shape, index_map, single_buffer):
    """BlockSpec for grid-constant operands (constant index_map -> fetched once).

    A single VMEM buffer suffices; fall back to the default double-buffered spec
    if this Pallas build does not support pipeline_mode / pl.Buffered.
    """
    if single_buffer:
        try:
            return pl.BlockSpec(block_shape, index_map,
                                pipeline_mode=pl.Buffered(buffer_count=1))
        except (AttributeError, TypeError):
            pass
    return pl.BlockSpec(block_shape, index_map)


def _select_tiling(B, N, itemsize, tb, tn):
    """Pick (batch tile tb, feature chunk tn); tn == N means no feature chunking."""
    auto_tb = tb is None
    if auto_tb:
        tb = _X_TILE_TARGET // max(1, N * itemsize)
        tb = max(128, min(8192, (tb // 128) * 128))
        if B >= 128:
            tb = min(tb, _round_up(B, 128))
            nt = _cdiv(B, tb)
            if nt == 1 and B > 128:
                # v7x megacore: >=2 batch tiles so both TensorCores get work.
                tb = max(128, _round_up(_cdiv(B, 2), 128))
            elif nt > 1 and nt % 2 == 1:
                tb_even = max(128, _round_up(_cdiv(B, nt + 1), 128))
                if _cdiv(B, tb_even) % 2 == 0:
                    tb = tb_even
    if B < 128:
        tb = min(tb, _round_up(B, 8))   # tiny batch: a single (near-)exact tile
    tb = max(8, _round_up(tb, 8))

    if tn is None:
        if 2 * tb * N * itemsize > _CHUNK_TRIGGER:
            if auto_tb:
                # Taller batch tiles amortize per-batch-tile re-streaming of v^T.
                tb = min(max(tb, 512), _round_up(B, 8 if B < 128 else 128))
            tn = max(128, ((_X_TILE_TARGET // max(1, tb * itemsize)) // 128) * 128)
        else:
            tn = N
    if tn < N:
        tn = max(128, _round_up(tn, 128))
    if tn >= N:
        tn = N
    return int(tb), int(tn)


def _fm_kernel(x_ref, w_ref, s_ref, vt_ref, b_ref, o_ref, *, precision):
    # x_ref : (TB, N)  streamed batch tile (native dtype: f32 or bf16)
    # w_ref : (1, N)   linear weight row, f32 (grid-resident)
    # s_ref : (1, N)   -0.5 * sum_k v[k, :]^2, f32 (grid-resident)
    # vt_ref: (N, Kp)  v^T zero-padded to Kp lanes, x's dtype (grid-resident)
    # b_ref : (1,)     linear bias (SMEM scalar)
    # o_ref : (1, TB)  lane-dense output row (sublane-1 store is tiny -> harmless)
    x = x_ref[...]
    # Single MXU matmul; zero-padded factor columns contribute 0 after squaring.
    r = jnp.dot(x, vt_ref[...], preferred_element_type=jnp.float32,
                precision=precision)                                    # (TB, Kp)
    quad = 0.5 * jnp.sum(r * r, axis=1)                                 # (TB,)
    # First-order + rewritten -(1/2)(x^2)@sum_k v^2 term, fused on the VPU.
    x32 = x.astype(jnp.float32)
    lin = jnp.sum(x32 * (w_ref[...] + x32 * s_ref[...]), axis=1)        # (TB,)
    o_ref[...] = jax.nn.sigmoid(quad + lin + b_ref[0])[None, :]


def _fm_kernel_chunked(x_ref, w_ref, s_ref, vt_ref, b_ref, o_ref,
                       r_acc, lin_acc, *, precision, n_valid, tn):
    # Large-N path: the trailing "arbitrary" grid axis walks feature chunks of
    # width tn, accumulating x@v^T and the VPU partial sums in f32 VMEM scratch.
    j = pl.program_id(1)

    @pl.when(j == 0)
    def _():
        r_acc[...] = jnp.zeros_like(r_acc)
        lin_acc[...] = jnp.zeros_like(lin_acc)

    x = x_ref[...]
    if n_valid % tn != 0:
        # Ragged final chunk: zero the out-of-bounds feature columns (their
        # padded contents are unspecified) so they cannot pollute the sums.
        col = lax.broadcasted_iota(jnp.int32, x.shape, 1) + j * tn
        x = jnp.where(col < n_valid, x, jnp.zeros_like(x))

    r_acc[...] += jnp.dot(x, vt_ref[...], preferred_element_type=jnp.float32,
                          precision=precision)
    x32 = x.astype(jnp.float32)
    lin_acc[...] += jnp.sum(x32 * (w_ref[...] + x32 * s_ref[...]),
                            axis=1)[None, :]

    @pl.when(j == pl.num_programs(1) - 1)
    def _():
        r = r_acc[...]
        quad = 0.5 * jnp.sum(r * r, axis=1)                             # (TB,)
        o_ref[...] = jax.nn.sigmoid(quad[None, :] + lin_acc[...] + b_ref[0])


@functools.partial(jax.jit, static_argnames=("tb", "tn", "single_buffer_consts"))
def fm_forward(x, w, b, v, *, tb=None, tn=None, single_buffer_consts=True):
    """Factorization Machine forward.

    x: (B, N) features (f32 or bf16 -- bf16 halves the dominant HBM stream);
    w: (1, N) torch nn.Linear weight; b: (1,) bias; v: (K, N) factor matrix.
    Returns sigmoid(first + second) with shape (B,), f32.
    """
    B, N = x.shape
    K = v.shape[0]

    # dtype handling: stream x as-is; match v^T to x's dtype for a native MXU pass.
    if x.dtype == jnp.bfloat16:
        vt_dtype = jnp.bfloat16
        precision = lax.Precision.DEFAULT
    else:
        if x.dtype != jnp.float32:
            x = x.astype(jnp.float32)     # uncommon dtypes: fall back to f32
        vt_dtype = jnp.float32
        precision = lax.Precision.HIGHEST  # exact f32 MXU passes for the f32 path
    itemsize = x.dtype.itemsize

    tb, tn = _select_tiling(B, N, itemsize, tb, tn)
    chunked = tn < N
    num_b = _cdiv(B, tb)
    num_n = _cdiv(N, tn)

    # Kp: next multiple of 128 only -- the zero MXU columns are free slack.
    kp = max(128, _round_up(K, 128))

    # One-time parameter preprocessing (small; amortized outside the x stream).
    v32 = v.astype(jnp.float32)
    w_row = w.reshape(1, N).astype(jnp.float32)
    s_row = (-0.5 * jnp.sum(v32 * v32, axis=0)).reshape(1, N)
    b1 = b.reshape(1).astype(jnp.float32)
    n_pad = _round_up(N, tn) if chunked else N
    vt_pad = jnp.zeros((n_pad, kp), vt_dtype).at[:N, :K].set(v32.T.astype(vt_dtype))
    if n_pad != N:
        w_row = jnp.pad(w_row, ((0, 0), (0, n_pad - N)))
        s_row = jnp.pad(s_row, ((0, 0), (0, n_pad - N)))

    if not chunked:
        kernel = functools.partial(_fm_kernel, precision=precision)
        grid = (num_b,)
        in_specs = [
            pl.BlockSpec((tb, N), lambda i: (i, 0)),                       # x tile
            _const_spec((1, N), lambda i: (0, 0), single_buffer_consts),   # w row
            _const_spec((1, N), lambda i: (0, 0), single_buffer_consts),   # -0.5*sum v^2
            _const_spec((N, kp), lambda i: (0, 0), single_buffer_consts),  # padded v^T
            pl.BlockSpec(memory_space=pltpu.MemorySpace.SMEM),             # bias
        ]
        out_specs = pl.BlockSpec((1, tb), lambda i: (i, 0))
        scratch_shapes = ()
        dim_sem = ("parallel",)
        needed = (2 * tb * N * itemsize + 2 * N * kp * itemsize
                  + 4 * N * 4 + 2 * tb * 4)
    else:
        kernel = functools.partial(_fm_kernel_chunked, precision=precision,
                                   n_valid=N, tn=tn)
        grid = (num_b, num_n)                      # reduction (feature) axis last
        in_specs = [
            pl.BlockSpec((tb, tn), lambda i, j: (i, j)),
            pl.BlockSpec((1, tn), lambda i, j: (0, j)),
            pl.BlockSpec((1, tn), lambda i, j: (0, j)),
            pl.BlockSpec((tn, kp), lambda i, j: (j, 0)),
            pl.BlockSpec(memory_space=pltpu.MemorySpace.SMEM),
        ]
        out_specs = pl.BlockSpec((1, tb), lambda i, j: (i, 0))
        scratch_shapes = (pltpu.VMEM((tb, kp), jnp.float32),   # x@v^T accumulator
                          pltpu.VMEM((1, tb), jnp.float32))    # linear partial sums
        dim_sem = ("parallel", "arbitrary")
        needed = (2 * tb * tn * itemsize + 2 * tn * kp * itemsize
                  + 4 * tn * 4 + 2 * tb * 4 + (tb * kp + tb) * 4)

    # Explicit VMEM budget: covers v5e's 16 MiB default scoped limit and stays
    # well inside v7x's 64 MiB/TC (residents are duplicated per TensorCore).
    vmem_limit = int(min(max(needed + (8 << 20), 32 << 20), 120 << 20))

    out = pl.pallas_call(
        kernel,
        out_shape=jax.ShapeDtypeStruct((num_b, tb), jnp.float32),
        grid=grid,
        in_specs=in_specs,
        out_specs=out_specs,
        scratch_shapes=scratch_shapes,
        compiler_params=pltpu.CompilerParams(
            dimension_semantics=dim_sem,
            vmem_limit_bytes=vmem_limit,
        ),
    )(x, w_row, s_row, vt_pad, b1)

    # Lane-dense (num_b, tb) rows -> flat batch; drop rows from the ragged tail.
    return out.reshape(num_b * tb)[:B]


def fm_reference(x, w, b, v):
    """Plain-JAX reference with the same semantics as the torch FM module."""
    hp = lax.Precision.HIGHEST
    x = x.astype(jnp.float32)
    v = v.astype(jnp.float32)
    w = w.astype(jnp.float32)
    first = (jnp.dot(x, w.T, precision=hp) + b.astype(jnp.float32))[:, 0]
    xv = jnp.dot(x, v.T, precision=hp)
    x2v2 = jnp.dot(x * x, (v * v).T, precision=hp)
    second = 0.5 * jnp.sum(xv * xv - x2v2, axis=1)
    return jax.nn.sigmoid(first + second)


if __name__ == "__main__":
    key = jax.random.PRNGKey(0)
    k_x, k_w, k_b, k_v, k2 = jax.random.split(key, 5)

    # ---- primary small test: FM(N=32, K=16) on a batch of 8 ----
    B, N, K = 8, 32, 16
    x = jax.random.normal(k_x, (B, N), dtype=jnp.float32)
    bound = 1.0 / (N ** 0.5)                        # nn.Linear(N, 1) default init
    w = jax.random.uniform(k_w, (1, N), minval=-bound, maxval=bound, dtype=jnp.float32)
    b = jax.random.uniform(k_b, (1,), minval=-bound, maxval=bound, dtype=jnp.float32)
    v = jax.random.uniform(k_v, (K, N), dtype=jnp.float32)   # torch.rand(K, N)

    sbuf = True
    try:
        out = fm_forward(x, w, b, v, single_buffer_consts=True)
        jax.block_until_ready(out)
    except Exception:
        # pl.Buffered(1) not supported by this Pallas build -> default buffering.
        sbuf = False
        out = fm_forward(x, w, b, v, single_buffer_consts=False)
        jax.block_until_ready(out)

    ref = fm_reference(x, w, b, v)
    assert out.shape == (B,)
    assert jnp.allclose(out, ref, atol=1e-5, rtol=1e-5), \
        float(jnp.max(jnp.abs(out - ref)))

    # ---- bf16-streaming path (halves the dominant HBM stream) ----
    out_bf16 = fm_forward(x.astype(jnp.bfloat16), w, b, v, single_buffer_consts=sbuf)
    jax.block_until_ready(out_bf16)
    assert out_bf16.shape == (B,)
    assert bool(jnp.all(jnp.isfinite(out_bf16)))
    assert bool(jnp.all((out_bf16 >= 0.0) & (out_bf16 <= 1.0)))

    # ---- ragged-batch + feature-chunked (large-N fallback) path ----
    B2, N2, K2 = 300, 400, 8
    k_x2, k_w2, k_b2, k_v2 = jax.random.split(k2, 4)
    x2 = 0.25 * jax.random.normal(k_x2, (B2, N2), dtype=jnp.float32)
    bound2 = 1.0 / (N2 ** 0.5)
    w2 = jax.random.uniform(k_w2, (1, N2), minval=-bound2, maxval=bound2, dtype=jnp.float32)
    b2 = jax.random.uniform(k_b2, (1,), minval=-bound2, maxval=bound2, dtype=jnp.float32)
    v2 = jax.random.uniform(k_v2, (K2, N2), dtype=jnp.float32)
    out2 = fm_forward(x2, w2, b2, v2, tb=128, tn=128,
                      single_buffer_consts=sbuf)    # force chunked + ragged tiles
    jax.block_until_ready(out2)
    ref2 = fm_reference(x2, w2, b2, v2)
    assert out2.shape == (B2,)
    assert jnp.allclose(out2, ref2, atol=1e-4, rtol=1e-4), \
        float(jnp.max(jnp.abs(out2 - ref2)))

    print("KERNEL_OK")
</pallas_src>

<mosaic_0001>
module attributes {stable_mosaic.version = 11 : i64} {
  func.func @_fm_kernel(%arg0: i32, %arg1: memref<8x32xf32, #tpu.memory_space<vmem>>, %arg2: memref<1x32xf32, #tpu.memory_space<vmem>>, %arg3: memref<1x32xf32, #tpu.memory_space<vmem>>, %arg4: memref<32x128xf32, #tpu.memory_space<vmem>>, %arg5: memref<1xf32, #tpu.memory_space<smem>>, %arg6: memref<1x8xf32, #tpu.memory_space<vmem>>) attributes {dimension_semantics = [#tpu.dimension_semantics<parallel>], iteration_bounds = array<i64: 1>, scalar_prefetch = 0 : i64, scratch_operands = 0 : i64, tpu.core_type = #tpu.core_type<tc>, window_params = [{transform_indices = @transform_0, window_bounds = array<i64: 8, 32>}, {pipeline_mode = #tpu.pipeline_mode<synchronous>, transform_indices = @transform_1, window_bounds = array<i64: 1, 32>}, {pipeline_mode = #tpu.pipeline_mode<synchronous>, transform_indices = @transform_2, window_bounds = array<i64: 1, 32>}, {pipeline_mode = #tpu.pipeline_mode<synchronous>, transform_indices = @transform_3, window_bounds = array<i64: 32, 128>}, {transform_indices = @transform_4, window_bounds = array<i64: 1>}, {transform_indices = @transform_5, window_bounds = array<i64: 1, 8>}]} {
    %c0 = arith.constant 0 : index
    %c0_0 = arith.constant 0 : index
    %0 = vector.load %arg1[%c0, %c0_0] : memref<8x32xf32, #tpu.memory_space<vmem>>, vector<8x32xf32>
    %c0_1 = arith.constant 0 : index
    %c0_2 = arith.constant 0 : index
    %1 = vector.load %arg4[%c0_1, %c0_2] : memref<32x128xf32, #tpu.memory_space<vmem>>, vector<32x128xf32>
    %cst = arith.constant dense<0.000000e+00> : vector<8x128xf32>
    %2 = tpu.matmul %0, %1, %cst {dimension_numbers = #tpu.dot_dimension_numbers<[1], [0], [0], [1], [0, 0, 1, 1], [], []>, precision = #tpu.contract_precision<fp32>} : vector<8x32xf32>, vector<32x128xf32>, vector<8x128xf32> -> vector<8x128xf32>
    %3 = arith.mulf %2, %2 : vector<8x128xf32>
    %cst_3 = arith.constant dense<0.000000e+00> : vector<8xf32>
    %4 = vector.multi_reduction <add>, %3, %cst_3 [1] : vector<8x128xf32> to vector<8xf32>
    %cst_4 = arith.constant 5.000000e-01 : f32
    %5 = vector.broadcast %cst_4 : f32 to vector<8xf32>
    %6 = arith.mulf %5, %4 : vector<8xf32>
    %c0_5 = arith.constant 0 : index
    %c0_6 = arith.constant 0 : index
    %7 = vector.load %arg2[%c0_5, %c0_6] : memref<1x32xf32, #tpu.memory_space<vmem>>, vector<1x32xf32>
    %c0_7 = arith.constant 0 : index
    %c0_8 = arith.constant 0 : index
    %8 = vector.load %arg3[%c0_7, %c0_8] : memref<1x32xf32, #tpu.memory_space<vmem>>, vector<1x32xf32>
    %9 = vector.broadcast %8 : vector<1x32xf32> to vector<8x32xf32>
    %10 = arith.mulf %0, %9 : vector<8x32xf32>
    %11 = vector.broadcast %7 : vector<1x32xf32> to vector<8x32xf32>
    %12 = arith.addf %11, %10 : vector<8x32xf32>
    %13 = arith.mulf %0, %12 : vector<8x32xf32>
    %cst_9 = arith.constant dense<0.000000e+00> : vector<8xf32>
    %14 = vector.multi_reduction <add>, %13, %cst_9 [1] : vector<8x32xf32> to vector<8xf32>
    %15 = arith.addf %6, %14 : vector<8xf32>
    %c0_10 = arith.constant 0 : index
    %16 = memref.load %arg5[%c0_10] : memref<1xf32, #tpu.memory_space<smem>>
    %17 = vector.broadcast %16 : f32 to vector<8xf32>
    %18 = arith.addf %15, %17 : vector<8xf32>
    %19 = arith.negf %18 : vector<8xf32>
    %20 = math.exp %19 : vector<8xf32>
    %cst_11 = arith.constant 1.000000e+00 : f32
    %21 = vector.broadcast %cst_11 : f32 to vector<8xf32>
    %22 = arith.addf %21, %20 : vector<8xf32>
    %23 = arith.divf %21, %22 : vector<8xf32>
    %24 = vector.shape_cast %23 : vector<8xf32> to vector<1x8xf32>
    %c0_12 = arith.constant 0 : index
    %c0_13 = arith.constant 0 : index
    %25 = vector.load %arg6[%c0_12, %c0_13] : memref<1x8xf32, #tpu.memory_space<vmem>>, vector<1x8xf32>
    tpu.vector_store %arg6[%c0_12, %c0_13], %24 {strides = array<i32>} : memref<1x8xf32, #tpu.memory_space<vmem>>, vector<1x8xf32>,
    return
  }
  func.func @transform_0(%arg0: i32) -> (i32, i32) {
    %c0_i32 = arith.constant 0 : i32
    %c0_i32_0 = arith.constant 0 : i32
    return %arg0, %c0_i32 : i32, i32
  }
  func.func @transform_1(%arg0: i32) -> (i32, i32) {
    %c0_i32 = arith.constant 0 : i32
    %c0_i32_0 = arith.constant 0 : i32
    %c0_i32_1 = arith.constant 0 : i32
    return %c0_i32, %c0_i32_0 : i32, i32
  }
  func.func @transform_2(%arg0: i32) -> (i32, i32) {
    %c0_i32 = arith.constant 0 : i32
    %c0_i32_0 = arith.constant 0 : i32
    %c0_i32_1 = arith.constant 0 : i32
    return %c0_i32, %c0_i32_0 : i32, i32
  }
  func.func @transform_3(%arg0: i32) -> (i32, i32) {
    %c0_i32 = arith.constant 0 : i32
    %c0_i32_0 = arith.constant 0 : i32
    %c0_i32_1 = arith.constant 0 : i32
    return %c0_i32, %c0_i32_0 : i32, i32
  }
  func.func @transform_4(%arg0: i32) -> i32 {
    %c0_i32 = arith.constant 0 : i32
    %c0_i32_0 = arith.constant 0 : i32
    return %c0_i32 : i32
  }
  func.func @transform_5(%arg0: i32) -> (i32, i32) {
    %c0_i32 = arith.constant 0 : i32
    %c0_i32_0 = arith.constant 0 : i32
    return %arg0, %c0_i32 : i32, i32
  }
}

module attributes {stable_mosaic.version = 11 : i64} {
  func.func @_fm_kernel(%arg0: i32, %arg1: memref<8x32xf32, #tpu.memory_space<vmem>>, %arg2: memref<1x32xf32, #tpu.memory_space<vmem>>, %arg3: memref<1x32xf32, #tpu.memory_space<vmem>>, %arg4: memref<32x128xf32, #tpu.memory_space<vmem>>, %arg5: memref<1xf32, #tpu.memory_space<smem>>, %arg6: memref<1x8xf32, #tpu.memory_space<vmem>>) attributes {dimension_semantics = [#tpu.dimension_semantics<parallel>], iteration_bounds = array<i64: 1>, scalar_prefetch = 0 : i64, scratch_operands = 0 : i64, tpu.core_type = #tpu.core_type<tc>, window_params = [{transform_indices = @transform_0, window_bounds = array<i64: 8, 32>}, {pipeline_mode = #tpu.pipeline_mode<synchronous>, transform_indices = @transform_1, window_bounds = array<i64: 1, 32>}, {pipeline_mode = #tpu.pipeline_mode<synchronous>, transform_indices = @transform_2, window_bounds = array<i64: 1, 32>}, {pipeline_mode = #tpu.pipeline_mode<synchronous>, transform_indices = @transform_3, window_bounds = array<i64: 32, 128>}, {transform_indices = @transform_4, window_bounds = array<i64: 1>}, {transform_indices = @transform_5, window_bounds = array<i64: 1, 8>}]} {
    %c0 = arith.constant 0 : index
    %c0_0 = arith.constant 0 : index
    %0 = vector.load %arg1[%c0, %c0_0] : memref<8x32xf32, #tpu.memory_space<vmem>>, vector<8x32xf32>
    %c0_1 = arith.constant 0 : index
    %c0_2 = arith.constant 0 : index
    %1 = vector.load %arg4[%c0_1, %c0_2] : memref<32x128xf32, #tpu.memory_space<vmem>>, vector<32x128xf32>
    %cst = arith.constant dense<0.000000e+00> : vector<8x128xf32>
    %2 = tpu.matmul %0, %1, %cst {dimension_numbers = #tpu.dot_dimension_numbers<[1], [0], [0], [1], [0, 0, 1, 1], [], []>, precision = #tpu.contract_precision<fp32>} : vector<8x32xf32>, vector<32x128xf32>, vector<8x128xf32> -> vector<8x128xf32>
    %3 = arith.mulf %2, %2 : vector<8x128xf32>
    %cst_3 = arith.constant dense<0.000000e+00> : vector<8xf32>
    %4 = vector.multi_reduction <add>, %3, %cst_3 [1] : vector<8x128xf32> to vector<8xf32>
    %cst_4 = arith.constant 5.000000e-01 : f32
    %5 = vector.broadcast %cst_4 : f32 to vector<8xf32>
    %6 = arith.mulf %5, %4 : vector<8xf32>
    %c0_5 = arith.constant 0 : index
    %c0_6 = arith.constant 0 : index
    %7 = vector.load %arg2[%c0_5, %c0_6] : memref<1x32xf32, #tpu.memory_space<vmem>>, vector<1x32xf32>
    %c0_7 = arith.constant 0 : index
    %c0_8 = arith.constant 0 : index
    %8 = vector.load %arg3[%c0_7, %c0_8] : memref<1x32xf32, #tpu.memory_space<vmem>>, vector<1x32xf32>
    %9 = vector.broadcast %8 : vector<1x32xf32> to vector<8x32xf32>
    %10 = arith.mulf %0, %9 : vector<8x32xf32>
    %11 = vector.broadcast %7 : vector<1x32xf32> to vector<8x32xf32>
    %12 = arith.addf %11, %10 : vector<8x32xf32>
    %13 = arith.mulf %0, %12 : vector<8x32xf32>
    %cst_9 = arith.constant dense<0.000000e+00> : vector<8xf32>
    %14 = vector.multi_reduction <add>, %13, %cst_9 [1] : vector<8x32xf32> to vector<8xf32>
    %15 = arith.addf %6, %14 : vector<8xf32>
    %c0_10 = arith.constant 0 : index
    %16 = memref.load %arg5[%c0_10] : memref<1xf32, #tpu.memory_space<smem>>
    %17 = vector.broadcast %16 : f32 to vector<8xf32>
    %18 = arith.addf %15, %17 : vector<8xf32>
    %19 = arith.negf %18 : vector<8xf32>
    %20 = math.exp %19 : vector<8xf32>
    %cst_11 = arith.constant 1.000000e+00 : f32
    %21 = vector.broadcast %cst_11 : f32 to vector<8xf32>
    %22 = arith.addf %21, %20 : vector<8xf32>
    %23 = arith.divf %21, %22 : vector<8xf32>
    %24 = vector.shape_cast %23 : vector<8xf32> to vector<1x8xf32>
    %c0_12 = arith.constant 0 : index
    %c0_13 = arith.constant 0 : index
    %25 = vector.load %arg6[%c0_12, %c0_13] : memref<1x8xf32, #tpu.memory_space<vmem>>, vector<1x8xf32>
    tpu.vector_store %arg6[%c0_12, %c0_13], %24 {strides = array<i32>} : memref<1x8xf32, #tpu.memory_space<vmem>>, vector<1x8xf32>,
    return
  }
  func.func @transform_0(%arg0: i32) -> (i32, i32) {
    %c0_i32 = arith.constant 0 : i32
    %c0_i32_0 = arith.constant 0 : i32
    return %arg0, %c0_i32 : i32, i32
  }
  func.func @transform_1(%arg0: i32) -> (i32, i32) {
    %c0_i32 = arith.constant 0 : i32
    %c0_i32_0 = arith.constant 0 : i32
    %c0_i32_1 = arith.constant 0 : i32
    return %c0_i32, %c0_i32_0 : i32, i32
  }
  func.func @transform_2(%arg0: i32) -> (i32, i32) {
    %c0_i32 = arith.constant 0 : i32
    %c0_i32_0 = arith.constant 0 : i32
    %c0_i32_1 = arith.constant 0 : i32
    return %c0_i32, %c0_i32_0 : i32, i32
  }
  func.func @transform_3(%arg0: i32) -> (i32, i32) {
    %c0_i32 = arith.constant 0 : i32
    %c0_i32_0 = arith.constant 0 : i32
    %c0_i32_1 = arith.constant 0 : i32
    return %c0_i32, %c0_i32_0 : i32, i32
  }
  func.func @transform_4(%arg0: i32) -> i32 {
    %c0_i32 = arith.constant 0 : i32
    %c0_i32_0 = arith.constant 0 : i32
    return %c0_i32 : i32
  }
  func.func @transform_5(%arg0: i32) -> (i32, i32) {
    %c0_i32 = arith.constant 0 : i32
    %c0_i32_0 = arith.constant 0 : i32
    return %arg0, %c0_i32 : i32, i32
  }
}

</mosaic_0001>

<llo_original>
// kernel: fm_forward.1
$region0: #{fm_forward.1}
  #allocation0 [shape = 'u32[]', space=smem, size = 0x4, offset = 0x4, fixed_abs, tag = 'smem constant byte address 0x4 - core index']
  #allocation1 [shape = 'u32[144,128]{1,0:T(1,128)}', space=vmem, size = 0x12000, scoped, tag = 'internal scratch']
  #allocation2 [shape = 'f32[1]{0:T(128)S(6)}', space=smem, size = 0x200, scoped, tag = 'scoped memory for fm_forward.1']
  %s0 = inlined_call_operand.vmem [shape: f32[8,32], index: 0, kind: input, shape index: {}]
  %s1 = inlined_call_operand.vmem [shape: f32[1,32], index: 1, kind: input, shape index: {}]
  %s2 = inlined_call_operand.vmem [shape: f32[1,32], index: 2, kind: input, shape index: {}]
  %s3 = inlined_call_operand.vmem [shape: f32[32,128], index: 3, kind: input, shape index: {}]
  %s4 = inlined_call_operand.<no memory space> [shape: f32[1], index: 4, kind: input, shape index: {}]
  %s5 = inlined_call_operand.hbm [shape: f32[1,8], index: 5, kind: output, shape index: {}]
  %s6 = sld [smem:[#allocation0]]
  $region30: #{fm_forward.1} parent=0
    _
  %s8 = ssub.s32 1, %s6
  %s9 = scalar_select 0, %s8, %s6
  %10 = sst [smem:[#allocation2]] %s4
  $region1: #{fm_forward.1} parent=0
    #allocation3 [shape = 'u8[512]{0}', space=vmem, size = 0x400, scoped, tag = 'output window, operand 0, single buffered']
    #allocation4 [shape = 's32[1]{0}', space=sflag, size = 0x4, scoped, tag = 'scoped memory for fm_forward.1']
    %11 = vsyncpa [#allocation4], 0
    // Predicated region
    $region2: #{fm_forward.1} parent=1 // pred_check
      _
    $region3: #{fm_forward.1} parent=1 // pred_check_branch
      %13 = sbr.rel (0) target = $region5
    $region4: #{fm_forward.1} parent=1 // pred_region
      _
    $region5: #{fm_forward.1} parent=1 // pred_fallthru
      _
    // Predicated region
    $region6: #{fm_forward.1} parent=1 // pred_check
      _
    $region7: #{fm_forward.1} parent=1 // pred_check_branch
      %15 = sbr.rel (0) target = $region9
    $region8: #{fm_forward.1} parent=1 // pred_region
      _
    $region9: #{fm_forward.1} parent=1 // pred_fallthru
      _
    // Predicated region
    $region10: #{fm_forward.1} parent=1 // pred_check
      _
    $region11: #{fm_forward.1} parent=1 // pred_check_branch
      %17 = sbr.rel (0) target = $region13
    $region12: #{fm_forward.1} parent=1 // pred_region
      _
    $region13: #{fm_forward.1} parent=1 // pred_fallthru
      _
    // Predicated region
    $region14: #{fm_forward.1} parent=1 // pred_check
      _
    $region15: #{fm_forward.1} parent=1 // pred_check_branch
      %19 = sbr.rel (0) target = $region17
    $region16: #{fm_forward.1} parent=1 // pred_region
      _
    $region17: #{fm_forward.1} parent=1 // pred_fallthru
      _
    // Predicated region
    $region18: #{fm_forward.1} parent=1 // pred_check
      _
    $region19: #{fm_forward.1} parent=1 // pred_check_branch
      %21 = sbr.rel (0) target = $region21
    $region20: #{fm_forward.1} parent=1 // pred_region
      _
    $region21: #{fm_forward.1} parent=1 // pred_fallthru
      _
    %v22 = vld [vmem:[%s0] sm:$0xff]
    %v23 = vld [vmem:[%s3] sm:$0xff]
    %v24 = vld [vmem:[%s3 + $0x8] sm:$0xff]
    %v25 = vld [vmem:[%s3 + $0x10] sm:$0xff]
    %v26 = vld [vmem:[%s3 + $0x18] sm:$0xff]
    %vm27 = vcmask 261120
    %v29 = vsel %vm27, %v22, 0
    %31 = vmatprep.subr.mxu0 0.0
    %v32 = vand.u32 %v23, 4294901760
    %33 = vmatpush1.msra.mxu0 %v32
    %34 = vmatprep.subr.mxu0 0.0
    %v35 = vand.u32 %v24, 4294901760
    %36 = vmatpush1.msra.mxu0 %v35
    %37 = vmatprep.subr.mxu0 0.0
    %v38 = vand.u32 %v25, 4294901760
    %39 = vmatpush1.msra.mxu0 %v38
    %40 = vmatprep.subr.mxu0 0.0
    %v41 = vand.u32 %v26, 4294901760
    %42 = vmatpush1.msra.mxu0 %v41
    %43 = vmatprep.subr.mxu0 0.0
    %44 = vmatpush1.msra.mxu0 0.0
    %45 = vmatprep.subr.mxu0 0.0
    %46 = vmatpush1.msra.mxu0 0.0
    %47 = vmatprep.subr.mxu0 0.0
    %48 = vmatpush1.msra.mxu0 0.0
    %49 = vmatprep.subr.mxu0 0.0
    %50 = vmatpush1.msra.mxu0 0.0
    %51 = vmatprep.subr.mxu0 0.0
    %52 = vmatpush1.msra.mxu0 0.0
    %53 = vmatprep.subr.mxu0 0.0
    %54 = vmatpush1.msra.mxu0 0.0
    %55 = vmatprep.subr.mxu0 0.0
    %56 = vmatpush1.msra.mxu0 0.0
    %57 = vmatprep.subr.mxu0 0.0
    %58 = vmatpush1.msra.mxu0 0.0
    %59 = vmatprep.subr.mxu0 0.0
    %60 = vmatpush1.msra.mxu0 0.0
    %61 = vmatprep.subr.mxu0 0.0
    %62 = vmatpush1.msra.mxu0 0.0
    %63 = vmatprep.subr.mxu0 0.0
    %64 = vmatpush1.msra.mxu0 0.0
    %65 = vmatprep.subr.mxu0 0.0
    %66 = vmatpush1.msra.mxu0 0.0
    %67 = vmatprep.subr.mxu0 0.0
    %68 = vmatpush1.msra.mxu0 0.0
    %69 = vmatprep.subr.mxu0 0.0
    %70 = vmatpush1.msra.mxu0 0.0
    %71 = vmatprep.subr.mxu0 0.0
    %72 = vmatpush1.msra.mxu0 0.0
    %73 = vmatprep.subr.mxu0 0.0
    %74 = vmatpush1.msra.mxu0 0.0
    %75 = vmatprep.subr.mxu0 0.0
    %76 = vmatpush1.msra.mxu0 0.0
    %77 = vmatprep.subr.mxu0 0.0
    %78 = vmatpush1.msra.mxu0 0.0
    %79 = vmatprep.subr.mxu0 0.0
    %80 = vmatpush1.msra.mxu0 0.0
    %81 = vmatprep.subr.mxu0 0.0
    %82 = vmatpush1.msra.mxu0 0.0
    %83 = vmatprep.subr.mxu0 0.0
    %84 = vmatpush1.msra.mxu0 0.0
    %85 = vmatprep.subr.mxu0 0.0
    %86 = vmatpush1.msra.mxu0 0.0
    %87 = vmatprep.subr.mxu0 0.0
    %88 = vmatpush1.msra.mxu0 0.0
    %89 = vmatprep.subr.mxu0 0.0
    %90 = vmatpush1.msra.mxu0 0.0
    %91 = vmatprep.subr.mxu0 0.0
    %92 = vmatpush1.msra.mxu0 0.0
    %93 = vmatprep.subr.mxu0 0.0
    %94 = vmatpush1.msra.mxu0 0.0
    %95 = vmatprep.subr.mxu0 0.0
    %96 = vmatpush1.msra.mxu0 0.0
    %97 = vmatprep.subr.mxu0 0.0
    %98 = vmatpush1.msra.mxu0 0.0
    %99 = vmatprep.mubr.f32.mxu0 0.0
    %v100 = vand.u32 %v29, 4294901760
    %v101 = vsub.f32 %v29, %v100
    %v102 = vand.u32 %v101, 4294901760
    %v103 = vsub.f32 %v101, %v102
    %v104 = vand.u32 %v103, 4294901760
    %105 = vmatmul.mubr.f32.gmra.mrb[0].mxu0 %v104
    %v106 = vpop.f32.mrb[0].mxu0
    %v107 = vadd.f32 0.0, %v106
    %v108 = vpop.f32.mrb[0].mxu0
    %109 = vdwg.mxu0
    %110 = vmatprep.subr.mxu0 0.0
    %v111 = vand.u32 %v23, 4294901760
    %v112 = vsub.f32 %v23, %v111
    %v113 = vand.u32 %v112, 4294901760
    %v114 = vsub.f32 %v112, %v113
    %v115 = vand.u32 %v114, 4294901760
    %116 = vmatpush1.msra.mxu0 %v115
    %117 = vmatprep.subr.mxu0 0.0
    %v118 = vand.u32 %v24, 4294901760
    %v119 = vsub.f32 %v24, %v118
    %v120 = vand.u32 %v119, 4294901760
    %v121 = vsub.f32 %v119, %v120
    %v122 = vand.u32 %v121, 4294901760
    %123 = vmatpush1.msra.mxu0 %v122
    %124 = vmatprep.subr.mxu0 0.0
    %v125 = vand.u32 %v25, 4294901760
    %v126 = vsub.f32 %v25, %v125
    %v127 = vand.u32 %v126, 4294901760
    %v128 = vsub.f32 %v126, %v127
    %v129 = vand.u32 %v128, 4294901760
    %130 = vmatpush1.msra.mxu0 %v129
    %131 = vmatprep.subr.mxu0 0.0
    %v132 = vand.u32 %v26, 4294901760
    %v133 = vsub.f32 %v26, %v132
    %v134 = vand.u32 %v133, 4294901760
    %v135 = vsub.f32 %v133, %v134
    %v136 = vand.u32 %v135, 4294901760
    %137 = vmatpush1.msra.mxu0 %v136
    %138 = vmatprep.subr.mxu0 0.0
    %139 = vmatpush1.msra.mxu0 0.0
    %140 = vmatprep.subr.mxu0 0.0
    %141 = vmatpush1.msra.mxu0 0.0
    %142 = vmatprep.subr.mxu0 0.0
    %143 = vmatpush1.msra.mxu0 0.0
    %144 = vmatprep.subr.mxu0 0.0
    %145 = vmatpush1.msra.mxu0 0.0
    %146 = vmatprep.subr.mxu0 0.0
    %147 = vmatpush1.msra.mxu0 0.0
    %148 = vmatprep.subr.mxu0 0.0
    %149 = vmatpush1.msra.mxu0 0.0
    %150 = vmatprep.subr.mxu0 0.0
    %151 = vmatpush1.msra.mxu0 0.0
    %152 = vmatprep.subr.mxu0 0.0
    %153 = vmatpush1.msra.mxu0 0.0
    %154 = vmatprep.subr.mxu0 0.0
    %155 = vmatpush1.msra.mxu0 0.0
    %156 = vmatprep.subr.mxu0 0.0
    %157 = vmatpush1.msra.mxu0 0.0
    %158 = vmatprep.subr.mxu0 0.0
    %159 = vmatpush1.msra.mxu0 0.0
    %160 = vmatprep.subr.mxu0 0.0
    %161 = vmatpush1.msra.mxu0 0.0
    %162 = vmatprep.subr.mxu0 0.0
    %163 = vmatpush1.msra.mxu0 0.0
    %164 = vmatprep.subr.mxu0 0.0
    %165 = vmatpush1.msra.mxu0 0.0
    %166 = vmatprep.subr.mxu0 0.0
    %167 = vmatpush1.msra.mxu0 0.0
    %168 = vmatprep.subr.mxu0 0.0
    %169 = vmatpush1.msra.mxu0 0.0
    %170 = vmatprep.subr.mxu0 0.0
    %171 = vmatpush1.msra.mxu0 0.0
    %172 = vmatprep.subr.mxu0 0.0
    %173 = vmatpush1.msra.mxu0 0.0
    %174 = vmatprep.subr.mxu0 0.0
    %175 = vmatpush1.msra.mxu0 0.0
    %176 = vmatprep.subr.mxu0 0.0
    %177 = vmatpush1.msra.mxu0 0.0
    %178 = vmatprep.subr.mxu0 0.0
    %179 = vmatpush1.msra.mxu0 0.0
    %180 = vmatprep.subr.mxu0 0.0
    %181 = vmatpush1.msra.mxu0 0.0
    %182 = vmatprep.subr.mxu0 0.0
    %183 = vmatpush1.msra.mxu0 0.0
    %184 = vmatprep.subr.mxu0 0.0
    %185 = vmatpush1.msra.mxu0 0.0
    %186 = vmatprep.subr.mxu0 0.0
    %187 = vmatpush1.msra.mxu0 0.0
    %188 = vmatprep.subr.mxu0 0.0
    %189 = vmatpush1.msra.mxu0 0.0
    %190 = vmatprep.subr.mxu0 0.0
    %191 = vmatpush1.msra.mxu0 0.0
    %192 = vmatprep.subr.mxu0 0.0
    %193 = vmatpush1.msra.mxu0 0.0
    %194 = vmatprep.mubr.f32.mxu0 0.0
    %v195 = vand.u32 %v29, 4294901760
    %196 = vmatmul.mubr.f32.gmra.mrb[0].mxu0 %v195
    %v197 = vpop.f32.mrb[0].mxu0
    %v198 = vadd.f32 %v107, %v197
    %v199 = vpop.f32.mrb[0].mxu0
    %200 = vdwg.mxu0
    %201 = vmatprep.subr.mxu0 0.0
    %v202 = vand.u32 %v23, 4294901760
    %v203 = vsub.f32 %v23, %v202
    %204 = vmatpush1.msra.mxu0 %v203
    %205 = vmatprep.subr.mxu0 0.0
    %v206 = vand.u32 %v24, 4294901760
    %v207 = vsub.f32 %v24, %v206
    %208 = vmatpush1.msra.mxu0 %v207
    %209 = vmatprep.subr.mxu0 0.0
    %v210 = vand.u32 %v25, 4294901760
    %v211 = vsub.f32 %v25, %v210
    %212 = vmatpush1.msra.mxu0 %v211
    %213 = vmatprep.subr.mxu0 0.0
    %v214 = vand.u32 %v26, 4294901760
    %v215 = vsub.f32 %v26, %v214
    %216 = vmatpush1.msra.mxu0 %v215
    %217 = vmatprep.subr.mxu0 0.0
    %218 = vmatpush1.msra.mxu0 0.0
    %219 = vmatprep.subr.mxu0 0.0
    %220 = vmatpush1.msra.mxu0 0.0
    %221 = vmatprep.subr.mxu0 0.0
    %222 = vmatpush1.msra.mxu0 0.0
    %223 = vmatprep.subr.mxu0 0.0
    %224 = vmatpush1.msra.mxu0 0.0
    %225 = vmatprep.subr.mxu0 0.0
    %226 = vmatpush1.msra.mxu0 0.0
    %227 = vmatprep.subr.mxu0 0.0
    %228 = vmatpush1.msra.mxu0 0.0
    %229 = vmatprep.subr.mxu0 0.0
    %230 = vmatpush1.msra.mxu0 0.0
    %231 = vmatprep.subr.mxu0 0.0
    %232 = vmatpush1.msra.mxu0 0.0
    %233 = vmatprep.subr.mxu0 0.0
    %234 = vmatpush1.msra.mxu0 0.0
    %235 = vmatprep.subr.mxu0 0.0
    %236 = vmatpush1.msra.mxu0 0.0
    %237 = vmatprep.subr.mxu0 0.0
    %238 = vmatpush1.msra.mxu0 0.0
    %239 = vmatprep.subr.mxu0 0.0
    %240 = vmatpush1.msra.mxu0 0.0
    %241 = vmatprep.subr.mxu0 0.0
    %242 = vmatpush1.msra.mxu0 0.0
    %243 = vmatprep.subr.mxu0 0.0
    %244 = vmatpush1.msra.mxu0 0.0
    %245 = vmatprep.subr.mxu0 0.0
    %246 = vmatpush1.msra.mxu0 0.0
    %247 = vmatprep.subr.mxu0 0.0
    %248 = vmatpush1.msra.mxu0 0.0
    %249 = vmatprep.subr.mxu0 0.0
    %250 = vmatpush1.msra.mxu0 0.0
    %251 = vmatprep.subr.mxu0 0.0
    %252 = vmatpush1.msra.mxu0 0.0
    %253 = vmatprep.subr.mxu0 0.0
    %254 = vmatpush1.msra.mxu0 0.0
    %255 = vmatprep.subr.mxu0 0.0
    %256 = vmatpush1.msra.mxu0 0.0
    %257 = vmatprep.subr.mxu0 0.0
    %258 = vmatpush1.msra.mxu0 0.0
    %259 = vmatprep.subr.mxu0 0.0
    %260 = vmatpush1.msra.mxu0 0.0
    %261 = vmatprep.subr.mxu0 0.0
    %262 = vmatpush1.msra.mxu0 0.0
    %263 = vmatprep.subr.mxu0 0.0
    %264 = vmatpush1.msra.mxu0 0.0
    %265 = vmatprep.subr.mxu0 0.0
    %266 = vmatpush1.msra.mxu0 0.0
    %267 = vmatprep.subr.mxu0 0.0
    %268 = vmatpush1.msra.mxu0 0.0
    %269 = vmatprep.subr.mxu0 0.0
    %270 = vmatpush1.msra.mxu0 0.0
    %271 = vmatprep.subr.mxu0 0.0
    %272 = vmatpush1.msra.mxu0 0.0
    %273 = vmatprep.mubr.f32.mxu0 0.0
    %v274 = vand.u32 %v29, 4294901760
    %v275 = vsub.f32 %v29, %v274
    %276 = vmatmul.mubr.f32.gmra.mrb[0].mxu0 %v275
    %v277 = vpop.f32.mrb[0].mxu0
    %v278 = vadd.f32 %v198, %v277
    %v279 = vpop.f32.mrb[0].mxu0
    %280 = vdwg.mxu0
    %281 = vmatprep.subr.mxu0 0.0
    %v282 = vand.u32 %v23, 4294901760
    %283 = vmatpush1.msra.mxu0 %v282
    %284 = vmatprep.subr.mxu0 0.0
    %v285 = vand.u32 %v24, 4294901760
    %286 = vmatpush1.msra.mxu0 %v285
    %287 = vmatprep.subr.mxu0 0.0
    %v288 = vand.u32 %v25, 4294901760
    %289 = vmatpush1.msra.mxu0 %v288
    %290 = vmatprep.subr.mxu0 0.0
    %v291 = vand.u32 %v26, 4294901760
    %292 = vmatpush1.msra.mxu0 %v291
    %293 = vmatprep.subr.mxu0 0.0
    %294 = vmatpush1.msra.mxu0 0.0
    %295 = vmatprep.subr.mxu0 0.0
    %296 = vmatpush1.msra.mxu0 0.0
    %297 = vmatprep.subr.mxu0 0.0
    %298 = vmatpush1.msra.mxu0 0.0
    %299 = vmatprep.subr.mxu0 0.0
    %300 = vmatpush1.msra.mxu0 0.0
    %301 = vmatprep.subr.mxu0 0.0
    %302 = vmatpush1.msra.mxu0 0.0
    %303 = vmatprep.subr.mxu0 0.0
    %304 = vmatpush1.msra.mxu0 0.0
    %305 = vmatprep.subr.mxu0 0.0
    %306 = vmatpush1.msra.mxu0 0.0
    %307 = vmatprep.subr.mxu0 0.0
    %308 = vmatpush1.msra.mxu0 0.0
    %309 = vmatprep.subr.mxu0 0.0
    %310 = vmatpush1.msra.mxu0 0.0
    %311 = vmatprep.subr.mxu0 0.0
    %312 = vmatpush1.msra.mxu0 0.0
    %313 = vmatprep.subr.mxu0 0.0
    %314 = vmatpush1.msra.mxu0 0.0
    %315 = vmatprep.subr.mxu0 0.0
    %316 = vmatpush1.msra.mxu0 0.0
    %317 = vmatprep.subr.mxu0 0.0
    %318 = vmatpush1.msra.mxu0 0.0
    %319 = vmatprep.subr.mxu0 0.0
    %320 = vmatpush1.msra.mxu0 0.0
    %321 = vmatprep.subr.mxu0 0.0
    %322 = vmatpush1.msra.mxu0 0.0
    %323 = vmatprep.subr.mxu0 0.0
    %324 = vmatpush1.msra.mxu0 0.0
    %325 = vmatprep.subr.mxu0 0.0
    %326 = vmatpush1.msra.mxu0 0.0
    %327 = vmatprep.subr.mxu0 0.0
    %328 = vmatpush1.msra.mxu0 0.0
    %329 = vmatprep.subr.mxu0 0.0
    %330 = vmatpush1.msra.mxu0 0.0
    %331 = vmatprep.subr.mxu0 0.0
    %332 = vmatpush1.msra.mxu0 0.0
    %333 = vmatprep.subr.mxu0 0.0
    %334 = vmatpush1.msra.mxu0 0.0
    %335 = vmatprep.subr.mxu0 0.0
    %336 = vmatpush1.msra.mxu0 0.0
    %337 = vmatprep.subr.mxu0 0.0
    %338 = vmatpush1.msra.mxu0 0.0
    %339 = vmatprep.subr.mxu0 0.0
    %340 = vmatpush1.msra.mxu0 0.0
    %341 = vmatprep.subr.mxu0 0.0
    %342 = vmatpush1.msra.mxu0 0.0
    %343 = vmatprep.subr.mxu0 0.0
    %344 = vmatpush1.msra.mxu0 0.0
    %345 = vmatprep.subr.mxu0 0.0
    %346 = vmatpush1.msra.mxu0 0.0
    %347 = vmatprep.subr.mxu0 0.0
    %348 = vmatpush1.msra.mxu0 0.0
    %349 = vmatprep.mubr.f32.mxu0 0.0
    %v350 = vand.u32 %v29, 4294901760
    %v351 = vsub.f32 %v29, %v350
    %v352 = vand.u32 %v351, 4294901760
    %353 = vmatmul.mubr.f32.gmra.mrb[0].mxu0 %v352
    %v354 = vpop.f32.mrb[0].mxu0
    %v355 = vadd.f32 %v278, %v354
    %v356 = vpop.f32.mrb[0].mxu0
    %357 = vdwg.mxu0
    %358 = vmatprep.subr.mxu0 0.0
    %v359 = vand.u32 %v23, 4294901760
    %v360 = vsub.f32 %v23, %v359
    %v361 = vand.u32 %v360, 4294901760
    %362 = vmatpush1.msra.mxu0 %v361
    %363 = vmatprep.subr.mxu0 0.0
    %v364 = vand.u32 %v24, 4294901760
    %v365 = vsub.f32 %v24, %v364
    %v366 = vand.u32 %v365, 4294901760
    %367 = vmatpush1.msra.mxu0 %v366
    %368 = vmatprep.subr.mxu0 0.0
    %v369 = vand.u32 %v25, 4294901760
    %v370 = vsub.f32 %v25, %v369
    %v371 = vand.u32 %v370, 4294901760
    %372 = vmatpush1.msra.mxu0 %v371
    %373 = vmatprep.subr.mxu0 0.0
    %v374 = vand.u32 %v26, 4294901760
    %v375 = vsub.f32 %v26, %v374
    %v376 = vand.u32 %v375, 4294901760
    %377 = vmatpush1.msra.mxu0 %v376
    %378 = vmatprep.subr.mxu0 0.0
    %379 = vmatpush1.msra.mxu0 0.0
    %380 = vmatprep.subr.mxu0 0.0
    %381 = vmatpush1.msra.mxu0 0.0
    %382 = vmatprep.subr.mxu0 0.0
    %383 = vmatpush1.msra.mxu0 0.0
    %384 = vmatprep.subr.mxu0 0.0
    %385 = vmatpush1.msra.mxu0 0.0
    %386 = vmatprep.subr.mxu0 0.0
    %387 = vmatpush1.msra.mxu0 0.0
    %388 = vmatprep.subr.mxu0 0.0
    %389 = vmatpush1.msra.mxu0 0.0
    %390 = vmatprep.subr.mxu0 0.0
    %391 = vmatpush1.msra.mxu0 0.0
    %392 = vmatprep.subr.mxu0 0.0
    %393 = vmatpush1.msra.mxu0 0.0
    %394 = vmatprep.subr.mxu0 0.0
    %395 = vmatpush1.msra.mxu0 0.0
    %396 = vmatprep.subr.mxu0 0.0
    %397 = vmatpush1.msra.mxu0 0.0
    %398 = vmatprep.subr.mxu0 0.0
    %399 = vmatpush1.msra.mxu0 0.0
    %400 = vmatprep.subr.mxu0 0.0
    %401 = vmatpush1.msra.mxu0 0.0
    %402 = vmatprep.subr.mxu0 0.0
    %403 = vmatpush1.msra.mxu0 0.0
    %404 = vmatprep.subr.mxu0 0.0
    %405 = vmatpush1.msra.mxu0 0.0
    %406 = vmatprep.subr.mxu0 0.0
    %407 = vmatpush1.msra.mxu0 0.0
    %408 = vmatprep.subr.mxu0 0.0
    %409 = vmatpush1.msra.mxu0 0.0
    %410 = vmatprep.subr.mxu0 0.0
    %411 = vmatpush1.msra.mxu0 0.0
    %412 = vmatprep.subr.mxu0 0.0
    %413 = vmatpush1.msra.mxu0 0.0
    %414 = vmatprep.subr.mxu0 0.0
    %415 = vmatpush1.msra.mxu0 0.0
    %416 = vmatprep.subr.mxu0 0.0
    %417 = vmatpush1.msra.mxu0 0.0
    %418 = vmatprep.subr.mxu0 0.0
    %419 = vmatpush1.msra.mxu0 0.0
    %420 = vmatprep.subr.mxu0 0.0
    %421 = vmatpush1.msra.mxu0 0.0
    %422 = vmatprep.subr.mxu0 0.0
    %423 = vmatpush1.msra.mxu0 0.0
    %424 = vmatprep.subr.mxu0 0.0
    %425 = vmatpush1.msra.mxu0 0.0
    %426 = vmatprep.subr.mxu0 0.0
    %427 = vmatpush1.msra.mxu0 0.0
    %428 = vmatprep.subr.mxu0 0.0
    %429 = vmatpush1.msra.mxu0 0.0
    %430 = vmatprep.subr.mxu0 0.0
    %431 = vmatpush1.msra.mxu0 0.0
    %432 = vmatprep.subr.mxu0 0.0
    %433 = vmatpush1.msra.mxu0 0.0
    %434 = vmatprep.mubr.f32.mxu0 0.0
    %v435 = vand.u32 %v29, 4294901760
    %436 = vmatmul.mubr.f32.gmra.mrb[0].mxu0 %v435
    %v437 = vpop.f32.mrb[0].mxu0
    %v438 = vadd.f32 %v355, %v437
    %v439 = vpop.f32.mrb[0].mxu0
    %440 = vdwg.mxu0
    %441 = vmatprep.subr.mxu0 0.0
    %v442 = vand.u32 %v23, 4294901760
    %443 = vmatpush1.msra.mxu0 %v442
    %444 = vmatprep.subr.mxu0 0.0
    %v445 = vand.u32 %v24, 4294901760
    %446 = vmatpush1.msra.mxu0 %v445
    %447 = vmatprep.subr.mxu0 0.0
    %v448 = vand.u32 %v25, 4294901760
    %449 = vmatpush1.msra.mxu0 %v448
    %450 = vmatprep.subr.mxu0 0.0
    %v451 = vand.u32 %v26, 4294901760
    %452 = vmatpush1.msra.mxu0 %v451
    %453 = vmatprep.subr.mxu0 0.0
    %454 = vmatpush1.msra.mxu0 0.0
    %455 = vmatprep.subr.mxu0 0.0
    %456 = vmatpush1.msra.mxu0 0.0
    %457 = vmatprep.subr.mxu0 0.0
    %458 = vmatpush1.msra.mxu0 0.0
    %459 = vmatprep.subr.mxu0 0.0
    %460 = vmatpush1.msra.mxu0 0.0
    %461 = vmatprep.subr.mxu0 0.0
    %462 = vmatpush1.msra.mxu0 0.0
    %463 = vmatprep.subr.mxu0 0.0
    %464 = vmatpush1.msra.mxu0 0.0
    %465 = vmatprep.subr.mxu0 0.0
    %466 = vmatpush1.msra.mxu0 0.0
    %467 = vmatprep.subr.mxu0 0.0
    %468 = vmatpush1.msra.mxu0 0.0
    %469 = vmatprep.subr.mxu0 0.0
    %470 = vmatpush1.msra.mxu0 0.0
    %471 = vmatprep.subr.mxu0 0.0
    %472 = vmatpush1.msra.mxu0 0.0
    %473 = vmatprep.subr.mxu0 0.0
    %474 = vmatpush1.msra.mxu0 0.0
    %475 = vmatprep.subr.mxu0 0.0
    %476 = vmatpush1.msra.mxu0 0.0
    %477 = vmatprep.subr.mxu0 0.0
    %478 = vmatpush1.msra.mxu0 0.0
    %479 = vmatprep.subr.mxu0 0.0
    %480 = vmatpush1.msra.mxu0 0.0
    %481 = vmatprep.subr.mxu0 0.0
    %482 = vmatpush1.msra.mxu0 0.0
    %483 = vmatprep.subr.mxu0 0.0
    %484 = vmatpush1.msra.mxu0 0.0
    %485 = vmatprep.subr.mxu0 0.0
    %486 = vmatpush1.msra.mxu0 0.0
    %487 = vmatprep.subr.mxu0 0.0
    %488 = vmatpush1.msra.mxu0 0.0
    %489 = vmatprep.subr.mxu0 0.0
    %490 = vmatpush1.msra.mxu0 0.0
    %491 = vmatprep.subr.mxu0 0.0
    %492 = vmatpush1.msra.mxu0 0.0
    %493 = vmatprep.subr.mxu0 0.0
    %494 = vmatpush1.msra.mxu0 0.0
    %495 = vmatprep.subr.mxu0 0.0
    %496 = vmatpush1.msra.mxu0 0.0
    %497 = vmatprep.subr.mxu0 0.0
    %498 = vmatpush1.msra.mxu0 0.0
    %499 = vmatprep.subr.mxu0 0.0
    %500 = vmatpush1.msra.mxu0 0.0
    %501 = vmatprep.subr.mxu0 0.0
    %502 = vmatpush1.msra.mxu0 0.0
    %503 = vmatprep.subr.mxu0 0.0
    %504 = vmatpush1.msra.mxu0 0.0
    %505 = vmatprep.subr.mxu0 0.0
    %506 = vmatpush1.msra.mxu0 0.0
    %507 = vmatprep.subr.mxu0 0.0
    %508 = vmatpush1.msra.mxu0 0.0
    %509 = vmatprep.mubr.f32.mxu0 0.0
    %v510 = vand.u32 %v29, 4294901760
    %511 = vmatmul.mubr.f32.gmra.mrb[0].mxu0 %v510
    %v512 = vpop.f32.mrb[0].mxu0
    %v513 = vadd.f32 %v438, %v512
    %v514 = vpop.f32.mrb[0].mxu0
    %515 = vdwg.mxu0
    %v516 = vmul.f32 %v513, %v513
    %517 = vadd.xlane.f32.xlu0 %v516
    %v518 = vpop.xlane.xlu0 %517
    %v519 = vmul.f32 %v518, 0.5
    %v520 = vld [vmem:[%s1] sm:$0x1]
    %v521 = vld [vmem:[%s2] sm:$0x1]
    %v523 = vlaneseq
    %v524 = vshrl.u32 %v523, 7
    %v525 = vsub.s32 0, %v524
    %v526 = vrot.slane %v521, %v525
    %v528 = vmul.f32 %v22, %v526
    %v530 = vlaneseq
    %v531 = vshrl.u32 %v530, 7
    %v532 = vsub.s32 0, %v531
    %v533 = vrot.slane %v520, %v532
    %v535 = vadd.f32 %v533, %v528
    %v536 = vmul.f32 %v22, %v535
    %v537 = vsel %vm27, %v536, 0.0
    %538 = vadd.xlane.f32.xlu0 %v537
    %v539 = vpop.xlane.xlu0 %538
    %v540 = vadd.f32 %v519, %v539
    %s541 = sld [smem:[#allocation2]]
    %v542 = vstv %s541
    %v543 = vadd.f32 %v540, %v542
    %v544 = vxor.u32 %v543, 2147483648
    %v545 = vmul.f32 %v544, 1.442695
    %v546 = vpow.pop %v545
    %v547 = vadd.f32 %v546, 1.0
    %v548 = vrcp.pop %v547
    %v549 = vmul.f32 1.0, %v548
    %v551 = vlaneseq
    %v552 = vand.u32 %v551, 127
    %v553 = vlaneseq
    %v554 = vshrl.u32 %v553, 7
    %v555 = vsub.s32 %v552, %v554
    %v556 = vrot.slane %v549, %v555
    %vm558 = vcmask 57344
    %559 = vst.msk [vmem:[#allocation3] sm:$0x1] %vm558, %v556
    // Predicated region
    $region22: #{fm_forward.1} parent=1 // pred_check
      _
    $region23: #{fm_forward.1} parent=1 // pred_check_branch
      %561 = sbr.rel (0) target = $region25
    $region24: #{fm_forward.1} parent=1 // pred_region
      %s563 = ssub.s32 16, 16
      %564 = vsyncadd [#allocation4], %s563
      %s566 = sshll.u32 [#allocation3], 4
      %s567 = int_to_ptr.vmem [resolvable:$true] %s566
      %569 = dma.vmem_to_hbm [thread:$0]  %s567, 16, %s5, [#allocation4]
    $region25: #{fm_forward.1} parent=1 // pred_fallthru
      _
    // Predicated region
    $region26: #{fm_forward.1} parent=1 // pred_check
      _
    $region27: #{fm_forward.1} parent=1 // pred_check_branch
      %571 = sbr.rel (0) target = $region29
    $region28: #{fm_forward.1} parent=1 // pred_region
      %572 = dma.done [#allocation4], 16
    $region29: #{fm_forward.1} parent=1 // pred_fallthru
      _
    %573 = vsyncpa [#allocation4], 1

// kernel: fm_forward.1
$region0: #{fm_forward.1}
  #allocation0 [shape = 'u32[]', space=smem, size = 0x4, offset = 0x4, fixed_abs, tag = 'smem constant byte address 0x4 - core index']
  #allocation1 [shape = 'u32[144,128]{1,0:T(1,128)}', space=vmem, size = 0x12000, scoped, tag = 'internal scratch']
  #allocation2 [shape = 'f32[1]{0:T(128)S(6)}', space=smem, size = 0x200, scoped, tag = 'scoped memory for fm_forward.1']
  %s0 = inlined_call_operand.vmem [shape: f32[8,32], index: 0, kind: input, shape index: {}]
  %s1 = inlined_call_operand.vmem [shape: f32[1,32], index: 1, kind: input, shape index: {}]
  %s2 = inlined_call_operand.vmem [shape: f32[1,32], index: 2, kind: input, shape index: {}]
  %s3 = inlined_call_operand.vmem [shape: f32[32,128], index: 3, kind: input, shape index: {}]
  %s4 = inlined_call_operand.<no memory space> [shape: f32[1], index: 4, kind: input, shape index: {}]
  %s5 = inlined_call_operand.hbm [shape: f32[1,8], index: 5, kind: output, shape index: {}]
  %s6 = sld [smem:[#allocation0]]
  $region30: #{fm_forward.1} parent=0
    _
  %s8 = ssub.s32 1, %s6
  %s9 = scalar_select 0, %s8, %s6
  %10 = sst [smem:[#allocation2]] %s4
  $region1: #{fm_forward.1} parent=0
    #allocation3 [shape = 'u8[512]{0}', space=vmem, size = 0x400, scoped, tag = 'output window, operand 0, single buffered']
    #allocation4 [shape = 's32[1]{0}', space=sflag, size = 0x4, scoped, tag = 'scoped memory for fm_forward.1']
    %11 = vsyncpa [#allocation4], 0
    // Predicated region
    $region2: #{fm_forward.1} parent=1 // pred_check
      _
    $region3: #{fm_forward.1} parent=1 // pred_check_branch
      %13 = sbr.rel (0) target = $region5
    $region4: #{fm_forward.1} parent=1 // pred_region
      _
    $region5: #{fm_forward.1} parent=1 // pred_fallthru
      _
    // Predicated region
    $region6: #{fm_forward.1} parent=1 // pred_check
      _
    $region7: #{fm_forward.1} parent=1 // pred_check_branch
      %15 = sbr.rel (0) target = $region9
    $region8: #{fm_forward.1} parent=1 // pred_region
      _
    $region9: #{fm_forward.1} parent=1 // pred_fallthru
      _
    // Predicated region
    $region10: #{fm_forward.1} parent=1 // pred_check
      _
    $region11: #{fm_forward.1} parent=1 // pred_check_branch
      %17 = sbr.rel (0) target = $region13
    $region12: #{fm_forward.1} parent=1 // pred_region
      _
    $region13: #{fm_forward.1} parent=1 // pred_fallthru
      _
    // Predicated region
    $region14: #{fm_forward.1} parent=1 // pred_check
      _
    $region15: #{fm_forward.1} parent=1 // pred_check_branch
      %19 = sbr.rel (0) target = $region17
    $region16: #{fm_forward.1} parent=1 // pred_region
      _
    $region17: #{fm_forward.1} parent=1 // pred_fallthru
      _
    // Predicated region
    $region18: #{fm_forward.1} parent=1 // pred_check
      _
    $region19: #{fm_forward.1} parent=1 // pred_check_branch
      %21 = sbr.rel (0) target = $region21
    $region20: #{fm_forward.1} parent=1 // pred_region
      _
    $region21: #{fm_forward.1} parent=1 // pred_fallthru
      _
    %v22 = vld [vmem:[%s0] sm:$0xff]
    %v23 = vld [vmem:[%s3] sm:$0xff]
    %v24 = vld [vmem:[%s3 + $0x8] sm:$0xff]
    %v25 = vld [vmem:[%s3 + $0x10] sm:$0xff]
    %v26 = vld [vmem:[%s3 + $0x18] sm:$0xff]
    %vm27 = vcmask 261120
    %v29 = vsel %vm27, %v22, 0
    %31 = vmatprep.subr.mxu0 0.0
    %v32 = vand.u32 %v23, 4294901760
    %33 = vmatpush1.msra.mxu0 %v32
    %34 = vmatprep.subr.mxu0 0.0
    %v35 = vand.u32 %v24, 4294901760
    %36 = vmatpush1.msra.mxu0 %v35
    %37 = vmatprep.subr.mxu0 0.0
    %v38 = vand.u32 %v25, 4294901760
    %39 = vmatpush1.msra.mxu0 %v38
    %40 = vmatprep.subr.mxu0 0.0
    %v41 = vand.u32 %v26, 4294901760
    %42 = vmatpush1.msra.mxu0 %v41
    %43 = vmatprep.subr.mxu0 0.0
    %44 = vmatpush1.msra.mxu0 0.0
    %45 = vmatprep.subr.mxu0 0.0
    %46 = vmatpush1.msra.mxu0 0.0
    %47 = vmatprep.subr.mxu0 0.0
    %48 = vmatpush1.msra.mxu0 0.0
    %49 = vmatprep.subr.mxu0 0.0
    %50 = vmatpush1.msra.mxu0 0.0
    %51 = vmatprep.subr.mxu0 0.0
    %52 = vmatpush1.msra.mxu0 0.0
    %53 = vmatprep.subr.mxu0 0.0
    %54 = vmatpush1.msra.mxu0 0.0
    %55 = vmatprep.subr.mxu0 0.0
    %56 = vmatpush1.msra.mxu0 0.0
    %57 = vmatprep.subr.mxu0 0.0
    %58 = vmatpush1.msra.mxu0 0.0
    %59 = vmatprep.subr.mxu0 0.0
    %60 = vmatpush1.msra.mxu0 0.0
    %61 = vmatprep.subr.mxu0 0.0
    %62 = vmatpush1.msra.mxu0 0.0
    %63 = vmatprep.subr.mxu0 0.0
    %64 = vmatpush1.msra.mxu0 0.0
    %65 = vmatprep.subr.mxu0 0.0
    %66 = vmatpush1.msra.mxu0 0.0
    %67 = vmatprep.subr.mxu0 0.0
    %68 = vmatpush1.msra.mxu0 0.0
    %69 = vmatprep.subr.mxu0 0.0
    %70 = vmatpush1.msra.mxu0 0.0
    %71 = vmatprep.subr.mxu0 0.0
    %72 = vmatpush1.msra.mxu0 0.0
    %73 = vmatprep.subr.mxu0 0.0
    %74 = vmatpush1.msra.mxu0 0.0
    %75 = vmatprep.subr.mxu0 0.0
    %76 = vmatpush1.msra.mxu0 0.0
    %77 = vmatprep.subr.mxu0 0.0
    %78 = vmatpush1.msra.mxu0 0.0
    %79 = vmatprep.subr.mxu0 0.0
    %80 = vmatpush1.msra.mxu0 0.0
    %81 = vmatprep.subr.mxu0 0.0
    %82 = vmatpush1.msra.mxu0 0.0
    %83 = vmatprep.subr.mxu0 0.0
    %84 = vmatpush1.msra.mxu0 0.0
    %85 = vmatprep.subr.mxu0 0.0
    %86 = vmatpush1.msra.mxu0 0.0
    %87 = vmatprep.subr.mxu0 0.0
    %88 = vmatpush1.msra.mxu0 0.0
    %89 = vmatprep.subr.mxu0 0.0
    %90 = vmatpush1.msra.mxu0 0.0
    %91 = vmatprep.subr.mxu0 0.0
    %92 = vmatpush1.msra.mxu0 0.0
    %93 = vmatprep.subr.mxu0 0.0
    %94 = vmatpush1.msra.mxu0 0.0
    %95 = vmatprep.subr.mxu0 0.0
    %96 = vmatpush1.msra.mxu0 0.0
    %97 = vmatprep.subr.mxu0 0.0
    %98 = vmatpush1.msra.mxu0 0.0
    %99 = vmatprep.mubr.f32.mxu0 0.0
    %v100 = vand.u32 %v29, 4294901760
    %v101 = vsub.f32 %v29, %v100
    %v102 = vand.u32 %v101, 4294901760
    %v103 = vsub.f32 %v101, %v102
    %v104 = vand.u32 %v103, 4294901760
    %105 = vmatmul.mubr.f32.gmra.mrb[0].mxu0 %v104
    %v106 = vpop.f32.mrb[0].mxu0
    %v107 = vadd.f32 0.0, %v106
    %v108 = vpop.f32.mrb[0].mxu0
    %109 = vdwg.mxu0
    %110 = vmatprep.subr.mxu0 0.0
    %v111 = vand.u32 %v23, 4294901760
    %v112 = vsub.f32 %v23, %v111
    %v113 = vand.u32 %v112, 4294901760
    %v114 = vsub.f32 %v112, %v113
    %v115 = vand.u32 %v114, 4294901760
    %116 = vmatpush1.msra.mxu0 %v115
    %117 = vmatprep.subr.mxu0 0.0
    %v118 = vand.u32 %v24, 4294901760
    %v119 = vsub.f32 %v24, %v118
    %v120 = vand.u32 %v119, 4294901760
    %v121 = vsub.f32 %v119, %v120
    %v122 = vand.u32 %v121, 4294901760
    %123 = vmatpush1.msra.mxu0 %v122
    %124 = vmatprep.subr.mxu0 0.0
    %v125 = vand.u32 %v25, 4294901760
    %v126 = vsub.f32 %v25, %v125
    %v127 = vand.u32 %v126, 4294901760
    %v128 = vsub.f32 %v126, %v127
    %v129 = vand.u32 %v128, 4294901760
    %130 = vmatpush1.msra.mxu0 %v129
    %131 = vmatprep.subr.mxu0 0.0
    %v132 = vand.u32 %v26, 4294901760
    %v133 = vsub.f32 %v26, %v132
    %v134 = vand.u32 %v133, 4294901760
    %v135 = vsub.f32 %v133, %v134
    %v136 = vand.u32 %v135, 4294901760
    %137 = vmatpush1.msra.mxu0 %v136
    %138 = vmatprep.subr.mxu0 0.0
    %139 = vmatpush1.msra.mxu0 0.0
    %140 = vmatprep.subr.mxu0 0.0
    %141 = vmatpush1.msra.mxu0 0.0
    %142 = vmatprep.subr.mxu0 0.0
    %143 = vmatpush1.msra.mxu0 0.0
    %144 = vmatprep.subr.mxu0 0.0
    %145 = vmatpush1.msra.mxu0 0.0
    %146 = vmatprep.subr.mxu0 0.0
    %147 = vmatpush1.msra.mxu0 0.0
    %148 = vmatprep.subr.mxu0 0.0
    %149 = vmatpush1.msra.mxu0 0.0
    %150 = vmatprep.subr.mxu0 0.0
    %151 = vmatpush1.msra.mxu0 0.0
    %152 = vmatprep.subr.mxu0 0.0
    %153 = vmatpush1.msra.mxu0 0.0
    %154 = vmatprep.subr.mxu0 0.0
    %155 = vmatpush1.msra.mxu0 0.0
    %156 = vmatprep.subr.mxu0 0.0
    %157 = vmatpush1.msra.mxu0 0.0
    %158 = vmatprep.subr.mxu0 0.0
    %159 = vmatpush1.msra.mxu0 0.0
    %160 = vmatprep.subr.mxu0 0.0
    %161 = vmatpush1.msra.mxu0 0.0
    %162 = vmatprep.subr.mxu0 0.0
    %163 = vmatpush1.msra.mxu0 0.0
    %164 = vmatprep.subr.mxu0 0.0
    %165 = vmatpush1.msra.mxu0 0.0
    %166 = vmatprep.subr.mxu0 0.0
    %167 = vmatpush1.msra.mxu0 0.0
    %168 = vmatprep.subr.mxu0 0.0
    %169 = vmatpush1.msra.mxu0 0.0
    %170 = vmatprep.subr.mxu0 0.0
    %171 = vmatpush1.msra.mxu0 0.0
    %172 = vmatprep.subr.mxu0 0.0
    %173 = vmatpush1.msra.mxu0 0.0
    %174 = vmatprep.subr.mxu0 0.0
    %175 = vmatpush1.msra.mxu0 0.0
    %176 = vmatprep.subr.mxu0 0.0
    %177 = vmatpush1.msra.mxu0 0.0
    %178 = vmatprep.subr.mxu0 0.0
    %179 = vmatpush1.msra.mxu0 0.0
    %180 = vmatprep.subr.mxu0 0.0
    %181 = vmatpush1.msra.mxu0 0.0
    %182 = vmatprep.subr.mxu0 0.0
    %183 = vmatpush1.msra.mxu0 0.0
    %184 = vmatprep.subr.mxu0 0.0
    %185 = vmatpush1.msra.mxu0 0.0
    %186 = vmatprep.subr.mxu0 0.0
    %187 = vmatpush1.msra.mxu0 0.0
    %188 = vmatprep.subr.mxu0 0.0
    %189 = vmatpush1.msra.mxu0 0.0
    %190 = vmatprep.subr.mxu0 0.0
    %191 = vmatpush1.msra.mxu0 0.0
    %192 = vmatprep.subr.mxu0 0.0
    %193 = vmatpush1.msra.mxu0 0.0
    %194 = vmatprep.mubr.f32.mxu0 0.0
    %v195 = vand.u32 %v29, 4294901760
    %196 = vmatmul.mubr.f32.gmra.mrb[0].mxu0 %v195
    %v197 = vpop.f32.mrb[0].mxu0
    %v198 = vadd.f32 %v107, %v197
    %v199 = vpop.f32.mrb[0].mxu0
    %200 = vdwg.mxu0
    %201 = vmatprep.subr.mxu0 0.0
    %v202 = vand.u32 %v23, 4294901760
    %v203 = vsub.f32 %v23, %v202
    %204 = vmatpush1.msra.mxu0 %v203
    %205 = vmatprep.subr.mxu0 0.0
    %v206 = vand.u32 %v24, 4294901760
    %v207 = vsub.f32 %v24, %v206
    %208 = vmatpush1.msra.mxu0 %v207
    %209 = vmatprep.subr.mxu0 0.0
    %v210 = vand.u32 %v25, 4294901760
    %v211 = vsub.f32 %v25, %v210
    %212 = vmatpush1.msra.mxu0 %v211
    %213 = vmatprep.subr.mxu0 0.0
    %v214 = vand.u32 %v26, 4294901760
    %v215 = vsub.f32 %v26, %v214
    %216 = vmatpush1.msra.mxu0 %v215
    %217 = vmatprep.subr.mxu0 0.0
    %218 = vmatpush1.msra.mxu0 0.0
    %219 = vmatprep.subr.mxu0 0.0
    %220 = vmatpush1.msra.mxu0 0.0
    %221 = vmatprep.subr.mxu0 0.0
    %222 = vmatpush1.msra.mxu0 0.0
    %223 = vmatprep.subr.mxu0 0.0
    %224 = vmatpush1.msra.mxu0 0.0
    %225 = vmatprep.subr.mxu0 0.0
    %226 = vmatpush1.msra.mxu0 0.0
    %227 = vmatprep.subr.mxu0 0.0
    %228 = vmatpush1.msra.mxu0 0.0
    %229 = vmatprep.subr.mxu0 0.0
    %230 = vmatpush1.msra.mxu0 0.0
    %231 = vmatprep.subr.mxu0 0.0
    %232 = vmatpush1.msra.mxu0 0.0
    %233 = vmatprep.subr.mxu0 0.0
    %234 = vmatpush1.msra.mxu0 0.0
    %235 = vmatprep.subr.mxu0 0.0
    %236 = vmatpush1.msra.mxu0 0.0
    %237 = vmatprep.subr.mxu0 0.0
    %238 = vmatpush1.msra.mxu0 0.0
    %239 = vmatprep.subr.mxu0 0.0
    %240 = vmatpush1.msra.mxu0 0.0
    %241 = vmatprep.subr.mxu0 0.0
    %242 = vmatpush1.msra.mxu0 0.0
    %243 = vmatprep.subr.mxu0 0.0
    %244 = vmatpush1.msra.mxu0 0.0
    %245 = vmatprep.subr.mxu0 0.0
    %246 = vmatpush1.msra.mxu0 0.0
    %247 = vmatprep.subr.mxu0 0.0
    %248 = vmatpush1.msra.mxu0 0.0
    %249 = vmatprep.subr.mxu0 0.0
    %250 = vmatpush1.msra.mxu0 0.0
    %251 = vmatprep.subr.mxu0 0.0
    %252 = vmatpush1.msra.mxu0 0.0
    %253 = vmatprep.subr.mxu0 0.0
    %254 = vmatpush1.msra.mxu0 0.0
    %255 = vmatprep.subr.mxu0 0.0
    %256 = vmatpush1.msra.mxu0 0.0
    %257 = vmatprep.subr.mxu0 0.0
    %258 = vmatpush1.msra.mxu0 0.0
    %259 = vmatprep.subr.mxu0 0.0
    %260 = vmatpush1.msra.mxu0 0.0
    %261 = vmatprep.subr.mxu0 0.0
    %262 = vmatpush1.msra.mxu0 0.0
    %263 = vmatprep.subr.mxu0 0.0
    %264 = vmatpush1.msra.mxu0 0.0
    %265 = vmatprep.subr.mxu0 0.0
    %266 = vmatpush1.msra.mxu0 0.0
    %267 = vmatprep.subr.mxu0 0.0
    %268 = vmatpush1.msra.mxu0 0.0
    %269 = vmatprep.subr.mxu0 0.0
    %270 = vmatpush1.msra.mxu0 0.0
    %271 = vmatprep.subr.mxu0 0.0
    %272 = vmatpush1.msra.mxu0 0.0
    %273 = vmatprep.mubr.f32.mxu0 0.0
    %v274 = vand.u32 %v29, 4294901760
    %v275 = vsub.f32 %v29, %v274
    %276 = vmatmul.mubr.f32.gmra.mrb[0].mxu0 %v275
    %v277 = vpop.f32.mrb[0].mxu0
    %v278 = vadd.f32 %v198, %v277
    %v279 = vpop.f32.mrb[0].mxu0
    %280 = vdwg.mxu0
    %281 = vmatprep.subr.mxu0 0.0
    %v282 = vand.u32 %v23, 4294901760
    %283 = vmatpush1.msra.mxu0 %v282
    %284 = vmatprep.subr.mxu0 0.0
    %v285 = vand.u32 %v24, 4294901760
    %286 = vmatpush1.msra.mxu0 %v285
    %287 = vmatprep.subr.mxu0 0.0
    %v288 = vand.u32 %v25, 4294901760
    %289 = vmatpush1.msra.mxu0 %v288
    %290 = vmatprep.subr.mxu0 0.0
    %v291 = vand.u32 %v26, 4294901760
    %292 = vmatpush1.msra.mxu0 %v291
    %293 = vmatprep.subr.mxu0 0.0
    %294 = vmatpush1.msra.mxu0 0.0
    %295 = vmatprep.subr.mxu0 0.0
    %296 = vmatpush1.msra.mxu0 0.0
    %297 = vmatprep.subr.mxu0 0.0
    %298 = vmatpush1.msra.mxu0 0.0
    %299 = vmatprep.subr.mxu0 0.0
    %300 = vmatpush1.msra.mxu0 0.0
    %301 = vmatprep.subr.mxu0 0.0
    %302 = vmatpush1.msra.mxu0 0.0
    %303 = vmatprep.subr.mxu0 0.0
    %304 = vmatpush1.msra.mxu0 0.0
    %305 = vmatprep.subr.mxu0 0.0
    %306 = vmatpush1.msra.mxu0 0.0
    %307 = vmatprep.subr.mxu0 0.0
    %308 = vmatpush1.msra.mxu0 0.0
    %309 = vmatprep.subr.mxu0 0.0
    %310 = vmatpush1.msra.mxu0 0.0
    %311 = vmatprep.subr.mxu0 0.0
    %312 = vmatpush1.msra.mxu0 0.0
    %313 = vmatprep.subr.mxu0 0.0
    %314 = vmatpush1.msra.mxu0 0.0
    %315 = vmatprep.subr.mxu0 0.0
    %316 = vmatpush1.msra.mxu0 0.0
    %317 = vmatprep.subr.mxu0 0.0
    %318 = vmatpush1.msra.mxu0 0.0
    %319 = vmatprep.subr.mxu0 0.0
    %320 = vmatpush1.msra.mxu0 0.0
    %321 = vmatprep.subr.mxu0 0.0
    %322 = vmatpush1.msra.mxu0 0.0
    %323 = vmatprep.subr.mxu0 0.0
    %324 = vmatpush1.msra.mxu0 0.0
    %325 = vmatprep.subr.mxu0 0.0
    %326 = vmatpush1.msra.mxu0 0.0
    %327 = vmatprep.subr.mxu0 0.0
    %328 = vmatpush1.msra.mxu0 0.0
    %329 = vmatprep.subr.mxu0 0.0
    %330 = vmatpush1.msra.mxu0 0.0
    %331 = vmatprep.subr.mxu0 0.0
    %332 = vmatpush1.msra.mxu0 0.0
    %333 = vmatprep.subr.mxu0 0.0
    %334 = vmatpush1.msra.mxu0 0.0
    %335 = vmatprep.subr.mxu0 0.0
    %336 = vmatpush1.msra.mxu0 0.0
    %337 = vmatprep.subr.mxu0 0.0
    %338 = vmatpush1.msra.mxu0 0.0
    %339 = vmatprep.subr.mxu0 0.0
    %340 = vmatpush1.msra.mxu0 0.0
    %341 = vmatprep.subr.mxu0 0.0
    %342 = vmatpush1.msra.mxu0 0.0
    %343 = vmatprep.subr.mxu0 0.0
    %344 = vmatpush1.msra.mxu0 0.0
    %345 = vmatprep.subr.mxu0 0.0
    %346 = vmatpush1.msra.mxu0 0.0
    %347 = vmatprep.subr.mxu0 0.0
    %348 = vmatpush1.msra.mxu0 0.0
    %349 = vmatprep.mubr.f32.mxu0 0.0
    %v350 = vand.u32 %v29, 4294901760
    %v351 = vsub.f32 %v29, %v350
    %v352 = vand.u32 %v351, 4294901760
    %353 = vmatmul.mubr.f32.gmra.mrb[0].mxu0 %v352
    %v354 = vpop.f32.mrb[0].mxu0
    %v355 = vadd.f32 %v278, %v354
    %v356 = vpop.f32.mrb[0].mxu0
    %357 = vdwg.mxu0
    %358 = vmatprep.subr.mxu0 0.0
    %v359 = vand.u32 %v23, 4294901760
    %v360 = vsub.f32 %v23, %v359
    %v361 = vand.u32 %v360, 4294901760
    %362 = vmatpush1.msra.mxu0 %v361
    %363 = vmatprep.subr.mxu0 0.0
    %v364 = vand.u32 %v24, 4294901760
    %v365 = vsub.f32 %v24, %v364
    %v366 = vand.u32 %v365, 4294901760
    %367 = vmatpush1.msra.mxu0 %v366
    %368 = vmatprep.subr.mxu0 0.0
    %v369 = vand.u32 %v25, 4294901760
    %v370 = vsub.f32 %v25, %v369
    %v371 = vand.u32 %v370, 4294901760
    %372 = vmatpush1.msra.mxu0 %v371
    %373 = vmatprep.subr.mxu0 0.0
    %v374 = vand.u32 %v26, 4294901760
    %v375 = vsub.f32 %v26, %v374
    %v376 = vand.u32 %v375, 4294901760
    %377 = vmatpush1.msra.mxu0 %v376
    %378 = vmatprep.subr.mxu0 0.0
    %379 = vmatpush1.msra.mxu0 0.0
    %380 = vmatprep.subr.mxu0 0.0
    %381 = vmatpush1.msra.mxu0 0.0
    %382 = vmatprep.subr.mxu0 0.0
    %383 = vmatpush1.msra.mxu0 0.0
    %384 = vmatprep.subr.mxu0 0.0
    %385 = vmatpush1.msra.mxu0 0.0
    %386 = vmatprep.subr.mxu0 0.0
    %387 = vmatpush1.msra.mxu0 0.0
    %388 = vmatprep.subr.mxu0 0.0
    %389 = vmatpush1.msra.mxu0 0.0
    %390 = vmatprep.subr.mxu0 0.0
    %391 = vmatpush1.msra.mxu0 0.0
    %392 = vmatprep.subr.mxu0 0.0
    %393 = vmatpush1.msra.mxu0 0.0
    %394 = vmatprep.subr.mxu0 0.0
    %395 = vmatpush1.msra.mxu0 0.0
    %396 = vmatprep.subr.mxu0 0.0
    %397 = vmatpush1.msra.mxu0 0.0
    %398 = vmatprep.subr.mxu0 0.0
    %399 = vmatpush1.msra.mxu0 0.0
    %400 = vmatprep.subr.mxu0 0.0
    %401 = vmatpush1.msra.mxu0 0.0
    %402 = vmatprep.subr.mxu0 0.0
    %403 = vmatpush1.msra.mxu0 0.0
    %404 = vmatprep.subr.mxu0 0.0
    %405 = vmatpush1.msra.mxu0 0.0
    %406 = vmatprep.subr.mxu0 0.0
    %407 = vmatpush1.msra.mxu0 0.0
    %408 = vmatprep.subr.mxu0 0.0
    %409 = vmatpush1.msra.mxu0 0.0
    %410 = vmatprep.subr.mxu0 0.0
    %411 = vmatpush1.msra.mxu0 0.0
    %412 = vmatprep.subr.mxu0 0.0
    %413 = vmatpush1.msra.mxu0 0.0
    %414 = vmatprep.subr.mxu0 0.0
    %415 = vmatpush1.msra.mxu0 0.0
    %416 = vmatprep.subr.mxu0 0.0
    %417 = vmatpush1.msra.mxu0 0.0
    %418 = vmatprep.subr.mxu0 0.0
    %419 = vmatpush1.msra.mxu0 0.0
    %420 = vmatprep.subr.mxu0 0.0
    %421 = vmatpush1.msra.mxu0 0.0
    %422 = vmatprep.subr.mxu0 0.0
    %423 = vmatpush1.msra.mxu0 0.0
    %424 = vmatprep.subr.mxu0 0.0
    %425 = vmatpush1.msra.mxu0 0.0
    %426 = vmatprep.subr.mxu0 0.0
    %427 = vmatpush1.msra.mxu0 0.0
    %428 = vmatprep.subr.mxu0 0.0
    %429 = vmatpush1.msra.mxu0 0.0
    %430 = vmatprep.subr.mxu0 0.0
    %431 = vmatpush1.msra.mxu0 0.0
    %432 = vmatprep.subr.mxu0 0.0
    %433 = vmatpush1.msra.mxu0 0.0
    %434 = vmatprep.mubr.f32.mxu0 0.0
    %v435 = vand.u32 %v29, 4294901760
    %436 = vmatmul.mubr.f32.gmra.mrb[0].mxu0 %v435
    %v437 = vpop.f32.mrb[0].mxu0
    %v438 = vadd.f32 %v355, %v437
    %v439 = vpop.f32.mrb[0].mxu0
    %440 = vdwg.mxu0
    %441 = vmatprep.subr.mxu0 0.0
    %v442 = vand.u32 %v23, 4294901760
    %443 = vmatpush1.msra.mxu0 %v442
    %444 = vmatprep.subr.mxu0 0.0
    %v445 = vand.u32 %v24, 4294901760
    %446 = vmatpush1.msra.mxu0 %v445
    %447 = vmatprep.subr.mxu0 0.0
    %v448 = vand.u32 %v25, 4294901760
    %449 = vmatpush1.msra.mxu0 %v448
    %450 = vmatprep.subr.mxu0 0.0
    %v451 = vand.u32 %v26, 4294901760
    %452 = vmatpush1.msra.mxu0 %v451
    %453 = vmatprep.subr.mxu0 0.0
    %454 = vmatpush1.msra.mxu0 0.0
    %455 = vmatprep.subr.mxu0 0.0
    %456 = vmatpush1.msra.mxu0 0.0
    %457 = vmatprep.subr.mxu0 0.0
    %458 = vmatpush1.msra.mxu0 0.0
    %459 = vmatprep.subr.mxu0 0.0
    %460 = vmatpush1.msra.mxu0 0.0
    %461 = vmatprep.subr.mxu0 0.0
    %462 = vmatpush1.msra.mxu0 0.0
    %463 = vmatprep.subr.mxu0 0.0
    %464 = vmatpush1.msra.mxu0 0.0
    %465 = vmatprep.subr.mxu0 0.0
    %466 = vmatpush1.msra.mxu0 0.0
    %467 = vmatprep.subr.mxu0 0.0
    %468 = vmatpush1.msra.mxu0 0.0
    %469 = vmatprep.subr.mxu0 0.0
    %470 = vmatpush1.msra.mxu0 0.0
    %471 = vmatprep.subr.mxu0 0.0
    %472 = vmatpush1.msra.mxu0 0.0
    %473 = vmatprep.subr.mxu0 0.0
    %474 = vmatpush1.msra.mxu0 0.0
    %475 = vmatprep.subr.mxu0 0.0
    %476 = vmatpush1.msra.mxu0 0.0
    %477 = vmatprep.subr.mxu0 0.0
    %478 = vmatpush1.msra.mxu0 0.0
    %479 = vmatprep.subr.mxu0 0.0
    %480 = vmatpush1.msra.mxu0 0.0
    %481 = vmatprep.subr.mxu0 0.0
    %482 = vmatpush1.msra.mxu0 0.0
    %483 = vmatprep.subr.mxu0 0.0
    %484 = vmatpush1.msra.mxu0 0.0
    %485 = vmatprep.subr.mxu0 0.0
    %486 = vmatpush1.msra.mxu0 0.0
    %487 = vmatprep.subr.mxu0 0.0
    %488 = vmatpush1.msra.mxu0 0.0
    %489 = vmatprep.subr.mxu0 0.0
    %490 = vmatpush1.msra.mxu0 0.0
    %491 = vmatprep.subr.mxu0 0.0
    %492 = vmatpush1.msra.mxu0 0.0
    %493 = vmatprep.subr.mxu0 0.0
    %494 = vmatpush1.msra.mxu0 0.0
    %495 = vmatprep.subr.mxu0 0.0
    %496 = vmatpush1.msra.mxu0 0.0
    %497 = vmatprep.subr.mxu0 0.0
    %498 = vmatpush1.msra.mxu0 0.0
    %499 = vmatprep.subr.mxu0 0.0
    %500 = vmatpush1.msra.mxu0 0.0
    %501 = vmatprep.subr.mxu0 0.0
    %502 = vmatpush1.msra.mxu0 0.0
    %503 = vmatprep.subr.mxu0 0.0
    %504 = vmatpush1.msra.mxu0 0.0
    %505 = vmatprep.subr.mxu0 0.0
    %506 = vmatpush1.msra.mxu0 0.0
    %507 = vmatprep.subr.mxu0 0.0
    %508 = vmatpush1.msra.mxu0 0.0
    %509 = vmatprep.mubr.f32.mxu0 0.0
    %v510 = vand.u32 %v29, 4294901760
    %511 = vmatmul.mubr.f32.gmra.mrb[0].mxu0 %v510
    %v512 = vpop.f32.mrb[0].mxu0
    %v513 = vadd.f32 %v438, %v512
    %v514 = vpop.f32.mrb[0].mxu0
    %515 = vdwg.mxu0
    %v516 = vmul.f32 %v513, %v513
    %517 = vadd.xlane.f32.xlu0 %v516
    %v518 = vpop.xlane.xlu0 %517
    %v519 = vmul.f32 %v518, 0.5
    %v520 = vld [vmem:[%s1] sm:$0x1]
    %v521 = vld [vmem:[%s2] sm:$0x1]
    %v523 = vlaneseq
    %v524 = vshrl.u32 %v523, 7
    %v525 = vsub.s32 0, %v524
    %v526 = vrot.slane %v521, %v525
    %v528 = vmul.f32 %v22, %v526
    %v530 = vlaneseq
    %v531 = vshrl.u32 %v530, 7
    %v532 = vsub.s32 0, %v531
    %v533 = vrot.slane %v520, %v532
    %v535 = vadd.f32 %v533, %v528
    %v536 = vmul.f32 %v22, %v535
    %v537 = vsel %vm27, %v536, 0.0
    %538 = vadd.xlane.f32.xlu0 %v537
    %v539 = vpop.xlane.xlu0 %538
    %v540 = vadd.f32 %v519, %v539
    %s541 = sld [smem:[#allocation2]]
    %v542 = vstv %s541
    %v543 = vadd.f32 %v540, %v542
    %v544 = vxor.u32 %v543, 2147483648
    %v545 = vmul.f32 %v544, 1.442695
    %v546 = vpow.pop %v545
    %v547 = vadd.f32 %v546, 1.0
    %v548 = vrcp.pop %v547
    %v549 = vmul.f32 1.0, %v548
    %v551 = vlaneseq
    %v552 = vand.u32 %v551, 127
    %v553 = vlaneseq
    %v554 = vshrl.u32 %v553, 7
    %v555 = vsub.s32 %v552, %v554
    %v556 = vrot.slane %v549, %v555
    %vm558 = vcmask 57344
    %559 = vst.msk [vmem:[#allocation3] sm:$0x1] %vm558, %v556
    // Predicated region
    $region22: #{fm_forward.1} parent=1 // pred_check
      _
    $region23: #{fm_forward.1} parent=1 // pred_check_branch
      %561 = sbr.rel (0) target = $region25
    $region24: #{fm_forward.1} parent=1 // pred_region
      %s563 = ssub.s32 16, 16
      %564 = vsyncadd [#allocation4], %s563
      %s566 = sshll.u32 [#allocation3], 4
      %s567 = int_to_ptr.vmem [resolvable:$true] %s566
      %569 = dma.vmem_to_hbm [thread:$0]  %s567, 16, %s5, [#allocation4]
    $region25: #{fm_forward.1} parent=1 // pred_fallthru
      _
    // Predicated region
    $region26: #{fm_forward.1} parent=1 // pred_check
      _
    $region27: #{fm_forward.1} parent=1 // pred_check_branch
      %571 = sbr.rel (0) target = $region29
    $region28: #{fm_forward.1} parent=1 // pred_region
      %572 = dma.done [#allocation4], 16
    $region29: #{fm_forward.1} parent=1 // pred_fallthru
      _
    %573 = vsyncpa [#allocation4], 1

</llo_original>
